<compile_context>
chip_gen: v6e
topology: v6e:2x2x1
jax: 0.10.0
libtpu: 0.0.40
codegen_flags: <defaults>
</compile_context>

<pallas_src>
import jax
import jax.numpy as jnp
import numpy as np
from jax.experimental import pallas as pl
from jax.experimental.pallas import tpu as pltpu

# Hidden widths fixed by the PyTorch module definition.
_CROWD_H1 = 512
_HID = 256


def value_net_kernel(x_ref, w1, b1, cw2, cb2, wce, wre, be, ew2r, eb2, out_ref):
    f32 = jnp.float32
    bf16 = jnp.bfloat16

    x = x_ref[...]  # (TB, hw + sd) bf16, already cast in the wrapper.

    # Fused first layer: [hs | ss] @ blockdiag(cw1, rw1) + [cb1 | rb1]
    hr = jnp.dot(x, w1[...], preferred_element_type=f32) + b1[...]
    hr = jnp.maximum(hr, 0.0)
    h1 = hr[:, :_CROWD_H1]        # relu(hs @ cw1 + cb1)   (TB, 512)
    r1 = hr[:, _CROWD_H1:]        # relu(ss @ rw1 + rb1)   (TB, 256)

    # crowd_embedding layer 2
    h2 = jnp.dot(h1.astype(bf16), cw2[...], preferred_element_type=f32) + cb2[...]
    h2 = jnp.maximum(h2, 0.0)     # (TB, 256)

    # Folded (crowd_emb / robot_emb -> encoder layer 1):
    #   e = relu(h2 @ (cw3 @ ew1_c) + r1 @ (rw2 @ ew1_r) + b_e)
    e = (jnp.dot(h2.astype(bf16), wce[...], preferred_element_type=f32)
         + jnp.dot(r1.astype(bf16), wre[...], preferred_element_type=f32)
         + be[...])
    e = jnp.maximum(e, 0.0)       # (TB, 256)

    # encoder layer 2 (256 -> 1): VPU multiply + XLU lane reduction.
    value = jnp.sum(e * ew2r[...], axis=-1, keepdims=True) + eb2[...]
    out_ref[...] = value          # (TB, 1) f32


def prepare_params(params, self_state_dim, embedding_dim, human_feat):
    """Fold the purely-linear tail layers and fuse the first layers.

    All folding is done in f32; weights are cast to bf16 exactly once.
    Returns the flat weight list consumed by the kernel.
    """
    (cw1, cb1), (cw2, cb2), (cw3, cb3), (rw1, rb1), (rw2, rb2), (ew1, eb1), (ew2, eb2) = params
    E = embedding_dim
    f32 = jnp.float32
    bf = lambda a: a.astype(jnp.bfloat16)

    ew1_r = ew1[:E].astype(f32)   # robot half of encoder weight  (E, 256)
    ew1_c = ew1[E:].astype(f32)   # crowd half of encoder weight  (E, 256)

    # Fold: cat([robot_emb, crowd_emb]) @ ew1 + eb1
    #     = r1 @ (rw2 @ ew1_r) + h2 @ (cw3 @ ew1_c) + (eb1 + rb2 @ ew1_r + cb3 @ ew1_c)
    W_ce = cw3.astype(f32) @ ew1_c                       # (256, 256)
    W_re = rw2.astype(f32) @ ew1_r                       # (256, 256)
    b_e = eb1 + cb3.astype(f32) @ ew1_c + rb2.astype(f32) @ ew1_r   # (1, 256)

    # Block-diagonal fused first layer: [hs | ss] @ W1 = [hs@cw1 | ss@rw1]
    hw, sd = human_feat, self_state_dim
    W1 = jnp.zeros((hw + sd, _CROWD_H1 + _HID), f32)
    W1 = W1.at[:hw, :_CROWD_H1].set(cw1)
    W1 = W1.at[hw:, _CROWD_H1:].set(rw1)
    b1 = jnp.concatenate([cb1, rb1], axis=1).astype(f32)            # (1, 768)

    ew2_row = ew2.reshape(1, -1).astype(f32)                        # (1, 256)

    return [bf(W1), b1, bf(cw2), cb2.astype(f32), bf(W_ce), bf(W_re),
            b_e.astype(f32), ew2_row, eb2.astype(f32)]


def value_network_forward(state, params, self_state_dim, embedding_dim, tile_b=None):
    """state: (B, human_num, input_dim) f32. params: list of (W(in,out), b(1,out)) f32."""
    B, H, D = state.shape
    human_dim = D - self_state_dim
    hw = H * human_dim

    self_state = state[:, 0, :self_state_dim]                           # (B, sd)
    human_state = state[:, :, self_state_dim:].reshape(B, hw)           # (B, hw)
    # Single merged activation input, cast to bf16 in the wrapper (halves
    # activation DMA bytes and drops in-kernel pack passes).
    x = jnp.concatenate([human_state, self_state], axis=1).astype(jnp.bfloat16)  # (B, hw+sd)

    weights = prepare_params(params, self_state_dim, embedding_dim, hw)

    # Batch tile heuristic:
    #   * tiny B: single full-batch tile.
    #   * otherwise: tiles up to 1024 rows (amortizes ~0.35us per-step grid
    #     overhead) but always >= 2 grid steps so the "parallel" batch axis
    #     can shard across both v7x TensorCores.
    if tile_b is None:
        if B <= 16:
            tile_b = B
        else:
            half = -(-B // 2)                       # ceil(B / 2)
            tile_b = min(1024, ((half + 7) // 8) * 8)
    grid = (pl.cdiv(B, tile_b),)

    feat = hw + self_state_dim
    act_spec = pl.BlockSpec((tile_b, feat), lambda i: (i, 0))

    def resident_spec(arr):
        # Constant block index -> weight stays VMEM-resident across grid steps.
        return pl.BlockSpec(arr.shape, lambda i: (0,) * arr.ndim)

    in_specs = [act_spec] + [resident_spec(w) for w in weights]

    flops = 2 * B * (feat * (_CROWD_H1 + _HID)      # fused first layer
                     + _CROWD_H1 * _HID             # crowd layer 2
                     + 2 * _HID * _HID              # folded encoder layer
                     + _HID)                        # final reduction
    bytes_accessed = (sum(int(np.prod(w.shape)) * w.dtype.itemsize for w in weights)
                      + int(x.size) * 2 + B * 4)

    return pl.pallas_call(
        value_net_kernel,
        out_shape=jax.ShapeDtypeStruct((B, 1), jnp.float32),
        grid=grid,
        in_specs=in_specs,
        out_specs=pl.BlockSpec((tile_b, 1), lambda i: (i, 0)),
        compiler_params=pltpu.CompilerParams(dimension_semantics=("parallel",)),
        cost_estimate=pl.CostEstimate(flops=flops, transcendentals=0,
                                      bytes_accessed=bytes_accessed),
    )(x, *weights)


def init_linear(key, fan_in, fan_out):
    # Deterministic PyTorch-style uniform(-1/sqrt(fan_in), 1/sqrt(fan_in)) init.
    kw, kb = jax.random.split(key)
    bound = 1.0 / np.sqrt(fan_in)
    w = jax.random.uniform(kw, (fan_in, fan_out), jnp.float32, -bound, bound)
    b = jax.random.uniform(kb, (1, fan_out), jnp.float32, -bound, bound)
    return w, b


def reference_forward(state, params, self_state_dim):
    B = state.shape[0]
    self_state = state[:, 0, :self_state_dim]
    human_state = state[:, :, self_state_dim:].reshape(B, -1)
    (cw1, cb1), (cw2, cb2), (cw3, cb3), (rw1, rb1), (rw2, rb2), (ew1, eb1), (ew2, eb2) = params
    h = jnp.maximum(human_state @ cw1 + cb1, 0.0)
    h = jnp.maximum(h @ cw2 + cb2, 0.0)
    crowd = h @ cw3 + cb3
    r = jnp.maximum(self_state @ rw1 + rb1, 0.0)
    robot = r @ rw2 + rb2
    feat = jnp.concatenate([robot, crowd], axis=1)
    e = jnp.maximum(feat @ ew1 + eb1, 0.0)
    return e @ ew2 + eb2


if __name__ == "__main__":
    # Module hyper-parameters (typical crowd_nav values, kept small).
    human_num = 5
    input_dim = 13
    self_state_dim = 6
    embedding_dim = 64
    human_dim = input_dim - self_state_dim          # 7
    batch = 2

    key = jax.random.PRNGKey(0)
    keys = jax.random.split(key, 8)

    # Parameters, in crowd / robot / encoder order (W already (in, out)).
    params = [
        init_linear(keys[0], human_num * human_dim, 512),
        init_linear(keys[1], 512, 256),
        init_linear(keys[2], 256, embedding_dim),
        init_linear(keys[3], self_state_dim, 256),
        init_linear(keys[4], 256, embedding_dim),
        init_linear(keys[5], 2 * embedding_dim, 256),
        init_linear(keys[6], 256, 1),
    ]

    # Small-shape check (single grid step, whole batch in one tile).
    state = jax.random.normal(keys[7], (batch, human_num, input_dim), jnp.float32)
    out = jax.block_until_ready(
        value_network_forward(state, params, self_state_dim, embedding_dim))
    ref = jax.block_until_ready(reference_forward(state, params, self_state_dim))
    np.testing.assert_allclose(np.asarray(out), np.asarray(ref), rtol=2e-2, atol=2e-2)
    assert out.shape == (batch, 1)

    # Larger-batch check exercising the multi-step batch grid (>= 2 steps,
    # VMEM-resident weights, pipelined activation tiles).
    big_batch = 512
    state_big = jax.random.normal(keys[7], (big_batch, human_num, input_dim), jnp.float32)
    out_big = jax.block_until_ready(
        value_network_forward(state_big, params, self_state_dim, embedding_dim))
    ref_big = jax.block_until_ready(reference_forward(state_big, params, self_state_dim))
    np.testing.assert_allclose(np.asarray(out_big), np.asarray(ref_big), rtol=2e-2, atol=2e-2)
    assert out_big.shape == (big_batch, 1)

    print("KERNEL_OK")
</pallas_src>

<mosaic_0001>
module attributes {stable_mosaic.version = 11 : i64} {
  func.func @value_net_kernel(%arg0: i32, %arg1: memref<2x41xbf16, #tpu.memory_space<vmem>>, %arg2: memref<41x768xbf16, #tpu.memory_space<vmem>>, %arg3: memref<1x768xf32, #tpu.memory_space<vmem>>, %arg4: memref<512x256xbf16, #tpu.memory_space<vmem>>, %arg5: memref<1x256xf32, #tpu.memory_space<vmem>>, %arg6: memref<256x256xbf16, #tpu.memory_space<vmem>>, %arg7: memref<256x256xbf16, #tpu.memory_space<vmem>>, %arg8: memref<1x256xf32, #tpu.memory_space<vmem>>, %arg9: memref<1x256xf32, #tpu.memory_space<vmem>>, %arg10: memref<1x1xf32, #tpu.memory_space<vmem>>, %arg11: memref<2x1xf32, #tpu.memory_space<vmem>>) attributes {dimension_semantics = [#tpu.dimension_semantics<parallel>], iteration_bounds = array<i64: 1>, scalar_prefetch = 0 : i64, scratch_operands = 0 : i64, tpu.core_type = #tpu.core_type<tc>, window_params = [{transform_indices = @transform_0, window_bounds = array<i64: 2, 41>}, {pipeline_mode = #tpu.pipeline_mode<synchronous>, transform_indices = @transform_1, window_bounds = array<i64: 41, 768>}, {pipeline_mode = #tpu.pipeline_mode<synchronous>, transform_indices = @transform_2, window_bounds = array<i64: 1, 768>}, {pipeline_mode = #tpu.pipeline_mode<synchronous>, transform_indices = @transform_3, window_bounds = array<i64: 512, 256>}, {pipeline_mode = #tpu.pipeline_mode<synchronous>, transform_indices = @transform_4, window_bounds = array<i64: 1, 256>}, {pipeline_mode = #tpu.pipeline_mode<synchronous>, transform_indices = @transform_5, window_bounds = array<i64: 256, 256>}, {pipeline_mode = #tpu.pipeline_mode<synchronous>, transform_indices = @transform_6, window_bounds = array<i64: 256, 256>}, {pipeline_mode = #tpu.pipeline_mode<synchronous>, transform_indices = @transform_7, window_bounds = array<i64: 1, 256>}, {pipeline_mode = #tpu.pipeline_mode<synchronous>, transform_indices = @transform_8, window_bounds = array<i64: 1, 256>}, {pipeline_mode = #tpu.pipeline_mode<synchronous>, transform_indices = @transform_9, window_bounds = array<i64: 1, 1>}, {transform_indices = @transform_10, window_bounds = array<i64: 2, 1>}]} {
    %c0 = arith.constant 0 : index
    %c0_0 = arith.constant 0 : index
    %0 = vector.load %arg1[%c0, %c0_0] : memref<2x41xbf16, #tpu.memory_space<vmem>>, vector<2x41xbf16>
    %c0_1 = arith.constant 0 : index
    %c0_2 = arith.constant 0 : index
    %1 = vector.load %arg2[%c0_1, %c0_2] : memref<41x768xbf16, #tpu.memory_space<vmem>>, vector<41x768xbf16>
    %cst = arith.constant dense<0.000000e+00> : vector<2x768xf32>
    %2 = tpu.matmul %0, %1, %cst {dimension_numbers = #tpu.dot_dimension_numbers<[1], [0], [0], [1], [0, 0, 1, 1], [], []>} : vector<2x41xbf16>, vector<41x768xbf16>, vector<2x768xf32> -> vector<2x768xf32>
    %c0_3 = arith.constant 0 : index
    %c0_4 = arith.constant 0 : index
    %3 = vector.load %arg3[%c0_3, %c0_4] : memref<1x768xf32, #tpu.memory_space<vmem>>, vector<1x768xf32>
    %4 = vector.broadcast %3 : vector<1x768xf32> to vector<2x768xf32>
    %5 = arith.addf %2, %4 : vector<2x768xf32>
    %cst_5 = arith.constant 0.000000e+00 : f32
    %6 = vector.broadcast %cst_5 : f32 to vector<2x768xf32>
    %7 = arith.maximumf %5, %6 : vector<2x768xf32>
    %8 = vector.extract_strided_slice %7 {offsets = [0, 0], sizes = [2, 512], strides = [1, 1]} : vector<2x768xf32> to vector<2x512xf32>
    %9 = vector.extract_strided_slice %7 {offsets = [0, 512], sizes = [2, 256], strides = [1, 1]} : vector<2x768xf32> to vector<2x256xf32>
    %10 = arith.truncf %8 : vector<2x512xf32> to vector<2x512xbf16>
    %c0_6 = arith.constant 0 : index
    %c0_7 = arith.constant 0 : index
    %11 = vector.load %arg4[%c0_6, %c0_7] : memref<512x256xbf16, #tpu.memory_space<vmem>>, vector<512x256xbf16>
    %cst_8 = arith.constant dense<0.000000e+00> : vector<2x256xf32>
    %12 = tpu.matmul %10, %11, %cst_8 {dimension_numbers = #tpu.dot_dimension_numbers<[1], [0], [0], [1], [0, 0, 1, 1], [], []>} : vector<2x512xbf16>, vector<512x256xbf16>, vector<2x256xf32> -> vector<2x256xf32>
    %c0_9 = arith.constant 0 : index
    %c0_10 = arith.constant 0 : index
    %13 = vector.load %arg5[%c0_9, %c0_10] : memref<1x256xf32, #tpu.memory_space<vmem>>, vector<1x256xf32>
    %14 = vector.broadcast %13 : vector<1x256xf32> to vector<2x256xf32>
    %15 = arith.addf %12, %14 : vector<2x256xf32>
    %cst_11 = arith.constant 0.000000e+00 : f32
    %16 = vector.broadcast %cst_11 : f32 to vector<2x256xf32>
    %17 = arith.maximumf %15, %16 : vector<2x256xf32>
    %18 = arith.truncf %17 : vector<2x256xf32> to vector<2x256xbf16>
    %c0_12 = arith.constant 0 : index
    %c0_13 = arith.constant 0 : index
    %19 = vector.load %arg6[%c0_12, %c0_13] : memref<256x256xbf16, #tpu.memory_space<vmem>>, vector<256x256xbf16>
    %cst_14 = arith.constant dense<0.000000e+00> : vector<2x256xf32>
    %20 = tpu.matmul %18, %19, %cst_14 {dimension_numbers = #tpu.dot_dimension_numbers<[1], [0], [0], [1], [0, 0, 1, 1], [], []>} : vector<2x256xbf16>, vector<256x256xbf16>, vector<2x256xf32> -> vector<2x256xf32>
    %21 = arith.truncf %9 : vector<2x256xf32> to vector<2x256xbf16>
    %c0_15 = arith.constant 0 : index
    %c0_16 = arith.constant 0 : index
    %22 = vector.load %arg7[%c0_15, %c0_16] : memref<256x256xbf16, #tpu.memory_space<vmem>>, vector<256x256xbf16>
    %cst_17 = arith.constant dense<0.000000e+00> : vector<2x256xf32>
    %23 = tpu.matmul %21, %22, %cst_17 {dimension_numbers = #tpu.dot_dimension_numbers<[1], [0], [0], [1], [0, 0, 1, 1], [], []>} : vector<2x256xbf16>, vector<256x256xbf16>, vector<2x256xf32> -> vector<2x256xf32>
    %24 = arith.addf %20, %23 : vector<2x256xf32>
    %c0_18 = arith.constant 0 : index
    %c0_19 = arith.constant 0 : index
    %25 = vector.load %arg8[%c0_18, %c0_19] : memref<1x256xf32, #tpu.memory_space<vmem>>, vector<1x256xf32>
    %26 = vector.broadcast %25 : vector<1x256xf32> to vector<2x256xf32>
    %27 = arith.addf %24, %26 : vector<2x256xf32>
    %cst_20 = arith.constant 0.000000e+00 : f32
    %28 = vector.broadcast %cst_20 : f32 to vector<2x256xf32>
    %29 = arith.maximumf %27, %28 : vector<2x256xf32>
    %c0_21 = arith.constant 0 : index
    %c0_22 = arith.constant 0 : index
    %30 = vector.load %arg9[%c0_21, %c0_22] : memref<1x256xf32, #tpu.memory_space<vmem>>, vector<1x256xf32>
    %31 = vector.broadcast %30 : vector<1x256xf32> to vector<2x256xf32>
    %32 = arith.mulf %29, %31 : vector<2x256xf32>
    %cst_23 = arith.constant dense<0.000000e+00> : vector<2xf32>
    %33 = vector.multi_reduction <add>, %32, %cst_23 [1] : vector<2x256xf32> to vector<2xf32>
    %34 = vector.shape_cast %33 : vector<2xf32> to vector<2x1xf32>
    %c0_24 = arith.constant 0 : index
    %c0_25 = arith.constant 0 : index
    %35 = vector.load %arg10[%c0_24, %c0_25] : memref<1x1xf32, #tpu.memory_space<vmem>>, vector<1x1xf32>
    %36 = vector.broadcast %35 : vector<1x1xf32> to vector<2x1xf32>
    %37 = arith.addf %34, %36 : vector<2x1xf32>
    %c0_26 = arith.constant 0 : index
    %c0_27 = arith.constant 0 : index
    %38 = vector.load %arg11[%c0_26, %c0_27] : memref<2x1xf32, #tpu.memory_space<vmem>>, vector<2x1xf32>
    tpu.vector_store %arg11[%c0_26, %c0_27], %37 {strides = array<i32>} : memref<2x1xf32, #tpu.memory_space<vmem>>, vector<2x1xf32>,
    return
  }
  func.func @transform_0(%arg0: i32) -> (i32, i32) {
    %c0_i32 = arith.constant 0 : i32
    %c0_i32_0 = arith.constant 0 : i32
    return %arg0, %c0_i32 : i32, i32
  }
  func.func @transform_1(%arg0: i32) -> (i32, i32) {
    %c0_i32 = arith.constant 0 : i32
    %c0_i32_0 = arith.constant 0 : i32
    %c0_i32_1 = arith.constant 0 : i32
    return %c0_i32, %c0_i32_0 : i32, i32
  }
  func.func @transform_2(%arg0: i32) -> (i32, i32) {
    %c0_i32 = arith.constant 0 : i32
    %c0_i32_0 = arith.constant 0 : i32
    %c0_i32_1 = arith.constant 0 : i32
    return %c0_i32, %c0_i32_0 : i32, i32
  }
  func.func @transform_3(%arg0: i32) -> (i32, i32) {
    %c0_i32 = arith.constant 0 : i32
    %c0_i32_0 = arith.constant 0 : i32
    %c0_i32_1 = arith.constant 0 : i32
    return %c0_i32, %c0_i32_0 : i32, i32
  }
  func.func @transform_4(%arg0: i32) -> (i32, i32) {
    %c0_i32 = arith.constant 0 : i32
    %c0_i32_0 = arith.constant 0 : i32
    %c0_i32_1 = arith.constant 0 : i32
    return %c0_i32, %c0_i32_0 : i32, i32
  }
  func.func @transform_5(%arg0: i32) -> (i32, i32) {
    %c0_i32 = arith.constant 0 : i32
    %c0_i32_0 = arith.constant 0 : i32
    %c0_i32_1 = arith.constant 0 : i32
    return %c0_i32, %c0_i32_0 : i32, i32
  }
  func.func @transform_6(%arg0: i32) -> (i32, i32) {
    %c0_i32 = arith.constant 0 : i32
    %c0_i32_0 = arith.constant 0 : i32
    %c0_i32_1 = arith.constant 0 : i32
    return %c0_i32, %c0_i32_0 : i32, i32
  }
  func.func @transform_7(%arg0: i32) -> (i32, i32) {
    %c0_i32 = arith.constant 0 : i32
    %c0_i32_0 = arith.constant 0 : i32
    %c0_i32_1 = arith.constant 0 : i32
    return %c0_i32, %c0_i32_0 : i32, i32
  }
  func.func @transform_8(%arg0: i32) -> (i32, i32) {
    %c0_i32 = arith.constant 0 : i32
    %c0_i32_0 = arith.constant 0 : i32
    %c0_i32_1 = arith.constant 0 : i32
    return %c0_i32, %c0_i32_0 : i32, i32
  }
  func.func @transform_9(%arg0: i32) -> (i32, i32) {
    %c0_i32 = arith.constant 0 : i32
    %c0_i32_0 = arith.constant 0 : i32
    %c0_i32_1 = arith.constant 0 : i32
    return %c0_i32, %c0_i32_0 : i32, i32
  }
  func.func @transform_10(%arg0: i32) -> (i32, i32) {
    %c0_i32 = arith.constant 0 : i32
    %c0_i32_0 = arith.constant 0 : i32
    return %arg0, %c0_i32 : i32, i32
  }
}

</mosaic_0001>

<llo_original>
// kernel: tpu_custom_call.1
$region0: #{tpu_custom_call.1}
  #allocation0 [shape = 'u32[]', space=smem, size = 0x4, offset = 0x4, fixed_abs, tag = 'smem constant byte address 0x4 - core index']
  #allocation1 [shape = 'u32[144,128]{1,0:T(1,128)}', space=vmem, size = 0x12000, scoped, tag = 'internal scratch']
  #allocation2 [shape = 'f32[1,1]{1,0:T(1,128)S(1)}', space=vmem, size = 0x200, scoped, tag = 'scoped memory for tpu_custom_call.1']
  %s0 = inlined_call_operand.vmem [shape: bf16[2,41], index: 0, kind: input, shape index: {}]
  %s1 = inlined_call_operand.hbm [shape: bf16[41,768], index: 1, kind: input, shape index: {}]
  %s2 = inlined_call_operand.hbm [shape: f32[1,768], index: 2, kind: input, shape index: {}]
  %s3 = inlined_call_operand.hbm [shape: bf16[512,256], index: 3, kind: input, shape index: {}]
  %s4 = inlined_call_operand.vmem [shape: f32[1,256], index: 4, kind: input, shape index: {}]
  %s5 = inlined_call_operand.hbm [shape: bf16[256,256], index: 5, kind: input, shape index: {}]
  %s6 = inlined_call_operand.hbm [shape: bf16[256,256], index: 6, kind: input, shape index: {}]
  %s7 = inlined_call_operand.vmem [shape: f32[1,256], index: 7, kind: input, shape index: {}]
  %s8 = inlined_call_operand.vmem [shape: f32[1,256], index: 8, kind: input, shape index: {}]
  %s9 = inlined_call_operand.<no memory space> [shape: f32[1,1], index: 9, kind: input, shape index: {}]
  %s10 = inlined_call_operand.vmem [shape: f32[2,1], index: 10, kind: output, shape index: {}]
  %s11 = sld [smem:[#allocation0]]
  $region70: #{tpu_custom_call.1} parent=0
    _
  %s13 = ssub.s32 1, %s11
  %s14 = scalar_select 0, %s13, %s11
  %v15 = vstv %s9
  %16 = vst [vmem:[#allocation2] sm:$0x1] %v15
  $region1: #{tpu_custom_call.1} parent=0
    #allocation3 [shape = 'u8[73728]{0}', space=vmem, size = 0x12000, scoped, tag = 'input window, operand 1, single buffered']
    #allocation4 [shape = 's32[1]{0}', space=sflag, size = 0x4, scoped, tag = 'scoped memory for tpu_custom_call.1']
    #allocation5 [shape = 'u8[3072]{0}', space=vmem, size = 0xc00, scoped, tag = 'input window, operand 2, single buffered']
    #allocation6 [shape = 's32[1]{0}', space=sflag, size = 0x4, scoped, tag = 'scoped memory for tpu_custom_call.1']
    #allocation7 [shape = 'u8[262144]{0}', space=vmem, size = 0x40000, scoped, tag = 'input window, operand 3, single buffered']
    #allocation8 [shape = 'u8[131072]{0}', space=vmem, size = 0x20000, scoped, tag = 'input window, operand 5, single buffered']
    #allocation9 [shape = 's32[1]{0}', space=sflag, size = 0x4, scoped, tag = 'scoped memory for tpu_custom_call.1']
    #allocation10 [shape = 'u8[131072]{0}', space=vmem, size = 0x20000, scoped, tag = 'input window, operand 6, single buffered']
    %17 = vsyncpa [#allocation4], 0
    %18 = vsyncpa [#allocation6], 0
    %19 = vsyncpa [#allocation9], 0
    // Predicated region
    $region2: #{tpu_custom_call.1} parent=1 // pred_check
      _
    $region3: #{tpu_custom_call.1} parent=1 // pred_check_branch
      %21 = sbr.rel (0) target = $region5
    $region4: #{tpu_custom_call.1} parent=1 // pred_region
      _
    $region5: #{tpu_custom_call.1} parent=1 // pred_fallthru
      _
    // Predicated region
    $region6: #{tpu_custom_call.1} parent=1 // pred_check
      _
    $region7: #{tpu_custom_call.1} parent=1 // pred_check_branch
      %23 = sbr.rel (0) target = $region9
    $region8: #{tpu_custom_call.1} parent=1 // pred_region
      %s25 = ssub.s32 2304, 2304
      %26 = vsyncadd [#allocation4], %s25
      %s27 = sshll.u32 [#allocation3], 4
      %s28 = int_to_ptr.vmem [resolvable:$true] %s27
      %33 = dma.hbm_to_vmem [thread:$0]  %s1, 2304, %s28, [#allocation4], 384, 384, 24
    $region9: #{tpu_custom_call.1} parent=1 // pred_fallthru
      _
    // Predicated region
    $region10: #{tpu_custom_call.1} parent=1 // pred_check
      _
    $region11: #{tpu_custom_call.1} parent=1 // pred_check_branch
      %35 = sbr.rel (0) target = $region13
    $region12: #{tpu_custom_call.1} parent=1 // pred_region
      %s37 = ssub.s32 96, 96
      %38 = vsyncadd [#allocation6], %s37
      %s40 = sshll.u32 [#allocation5], 4
      %s41 = int_to_ptr.vmem [resolvable:$true] %s40
      %43 = dma.hbm_to_vmem [thread:$0]  %s2, 96, %s41, [#allocation6]
    $region13: #{tpu_custom_call.1} parent=1 // pred_fallthru
      _
    // Predicated region
    $region14: #{tpu_custom_call.1} parent=1 // pred_check
      _
    $region15: #{tpu_custom_call.1} parent=1 // pred_check_branch
      %45 = sbr.rel (0) target = $region17
    $region16: #{tpu_custom_call.1} parent=1 // pred_region
      %s47 = ssub.s32 8192, 8192
      %48 = vsyncadd [#allocation6], %s47
      %s49 = sshll.u32 [#allocation7], 4
      %s50 = int_to_ptr.vmem [resolvable:$true] %s49
      %55 = dma.hbm_to_vmem [thread:$0]  %s3, 8192, %s50, [#allocation6], 128, 128, 8
    $region17: #{tpu_custom_call.1} parent=1 // pred_fallthru
      _
    // Predicated region
    $region18: #{tpu_custom_call.1} parent=1 // pred_check
      _
    $region19: #{tpu_custom_call.1} parent=1 // pred_check_branch
      %57 = sbr.rel (0) target = $region21
    $region20: #{tpu_custom_call.1} parent=1 // pred_region
      _
    $region21: #{tpu_custom_call.1} parent=1 // pred_fallthru
      _
    // Predicated region
    $region22: #{tpu_custom_call.1} parent=1 // pred_check
      _
    $region23: #{tpu_custom_call.1} parent=1 // pred_check_branch
      %59 = sbr.rel (0) target = $region25
    $region24: #{tpu_custom_call.1} parent=1 // pred_region
      %s61 = ssub.s32 4096, 4096
      %62 = vsyncadd [#allocation9], %s61
      %s63 = sshll.u32 [#allocation8], 4
      %s64 = int_to_ptr.vmem [resolvable:$true] %s63
      %69 = dma.hbm_to_vmem [thread:$0]  %s5, 4096, %s64, [#allocation9], 128, 128, 8
    $region25: #{tpu_custom_call.1} parent=1 // pred_fallthru
      _
    // Predicated region
    $region26: #{tpu_custom_call.1} parent=1 // pred_check
      _
    $region27: #{tpu_custom_call.1} parent=1 // pred_check_branch
      %71 = sbr.rel (0) target = $region29
    $region28: #{tpu_custom_call.1} parent=1 // pred_region
      %s73 = ssub.s32 4096, 4096
      %74 = vsyncadd [#allocation9], %s73
      %s75 = sshll.u32 [#allocation10], 4
      %s76 = int_to_ptr.vmem [resolvable:$true] %s75
      %81 = dma.hbm_to_vmem [thread:$0]  %s6, 4096, %s76, [#allocation9], 128, 128, 8
    $region29: #{tpu_custom_call.1} parent=1 // pred_fallthru
      _
    // Predicated region
    $region30: #{tpu_custom_call.1} parent=1 // pred_check
      _
    $region31: #{tpu_custom_call.1} parent=1 // pred_check_branch
      %83 = sbr.rel (0) target = $region33
    $region32: #{tpu_custom_call.1} parent=1 // pred_region
      _
    $region33: #{tpu_custom_call.1} parent=1 // pred_fallthru
      _
    // Predicated region
    $region34: #{tpu_custom_call.1} parent=1 // pred_check
      _
    $region35: #{tpu_custom_call.1} parent=1 // pred_check_branch
      %85 = sbr.rel (0) target = $region37
    $region36: #{tpu_custom_call.1} parent=1 // pred_region
      _
    $region37: #{tpu_custom_call.1} parent=1 // pred_fallthru
      _
    // Predicated region
    $region38: #{tpu_custom_call.1} parent=1 // pred_check
      _
    $region39: #{tpu_custom_call.1} parent=1 // pred_check_branch
      %87 = sbr.rel (0) target = $region41
    $region40: #{tpu_custom_call.1} parent=1 // pred_region
      _
    $region41: #{tpu_custom_call.1} parent=1 // pred_fallthru
      _
    // Predicated region
    $region42: #{tpu_custom_call.1} parent=1 // pred_check
      _
    $region43: #{tpu_custom_call.1} parent=1 // pred_check_branch
      %89 = sbr.rel (0) target = $region45
    $region44: #{tpu_custom_call.1} parent=1 // pred_region
      %90 = dma.done [#allocation4], 2304
    $region45: #{tpu_custom_call.1} parent=1 // pred_fallthru
      _
    // Predicated region
    $region46: #{tpu_custom_call.1} parent=1 // pred_check
      _
    $region47: #{tpu_custom_call.1} parent=1 // pred_check_branch
      %92 = sbr.rel (0) target = $region49
    $region48: #{tpu_custom_call.1} parent=1 // pred_region
      %93 = dma.done [#allocation6], 96
    $region49: #{tpu_custom_call.1} parent=1 // pred_fallthru
      _
    // Predicated region
    $region50: #{tpu_custom_call.1} parent=1 // pred_check
      _
    $region51: #{tpu_custom_call.1} parent=1 // pred_check_branch
      %95 = sbr.rel (0) target = $region53
    $region52: #{tpu_custom_call.1} parent=1 // pred_region
      %96 = dma.done [#allocation6], 8192
    $region53: #{tpu_custom_call.1} parent=1 // pred_fallthru
      _
    // Predicated region
    $region54: #{tpu_custom_call.1} parent=1 // pred_check
      _
    $region55: #{tpu_custom_call.1} parent=1 // pred_check_branch
      %98 = sbr.rel (0) target = $region57
    $region56: #{tpu_custom_call.1} parent=1 // pred_region
      %99 = dma.done [#allocation9], 4096
    $region57: #{tpu_custom_call.1} parent=1 // pred_fallthru
      _
    // Predicated region
    $region58: #{tpu_custom_call.1} parent=1 // pred_check
      _
    $region59: #{tpu_custom_call.1} parent=1 // pred_check_branch
      %101 = sbr.rel (0) target = $region61
    $region60: #{tpu_custom_call.1} parent=1 // pred_region
      %102 = dma.done [#allocation9], 4096
    $region61: #{tpu_custom_call.1} parent=1 // pred_fallthru
      _
    %v104 = vld [vmem:[%s0] sm:$0x1]
    %v105 = vld [vmem:[#allocation3] sm:$0xff]
    %v106 = vld [vmem:[#allocation3 + $0x8] sm:$0xff]
    %v107 = vld [vmem:[#allocation3 + $0x10] sm:$0xff]
    %v108 = vld [vmem:[#allocation3 + $0x18] sm:$0xff]
    %v109 = vld [vmem:[#allocation3 + $0x20] sm:$0xff]
    %v110 = vld [vmem:[#allocation3 + $0x28] sm:$0xff]
    %v111 = vld [vmem:[#allocation3 + $0x30] sm:$0xff]
    %v112 = vld [vmem:[#allocation3 + $0x38] sm:$0xff]
    %v113 = vld [vmem:[#allocation3 + $0x40] sm:$0xff]
    %v114 = vld [vmem:[#allocation3 + $0x48] sm:$0xff]
    %v115 = vld [vmem:[#allocation3 + $0x50] sm:$0xff]
    %v116 = vld [vmem:[#allocation3 + $0x58] sm:$0xff]
    %v117 = vld [vmem:[#allocation3 + $0x60] sm:$0xff]
    %v118 = vld [vmem:[#allocation3 + $0x68] sm:$0xff]
    %v119 = vld [vmem:[#allocation3 + $0x70] sm:$0xff]
    %v120 = vld [vmem:[#allocation3 + $0x78] sm:$0x11]
    %v121 = vld [vmem:[#allocation3 + $0x80] sm:$0x11]
    %v122 = vld [vmem:[#allocation3 + $0x88] sm:$0x11]
    %v123 = vld [vmem:[#allocation5] sm:$0x3f]
    %v125 = vlaneseq
    %v126 = vshrl.u32 %v125, 7
    %v127 = vsub.s32 0, %v126
    %v128 = vrot.slane %v123, %v127
    %v129 = vlaneseq
    %v130 = vshrl.u32 %v129, 7
    %v131 = vsub.s32 1, %v130
    %v132 = vrot.slane %v123, %v131
    %v133 = vlaneseq
    %v134 = vshrl.u32 %v133, 7
    %v135 = vsub.s32 2, %v134
    %v136 = vrot.slane %v123, %v135
    %v137 = vlaneseq
    %v138 = vshrl.u32 %v137, 7
    %v139 = vsub.s32 3, %v138
    %v140 = vrot.slane %v123, %v139
    %v141 = vlaneseq
    %v142 = vshrl.u32 %v141, 7
    %v143 = vsub.s32 4, %v142
    %v144 = vrot.slane %v123, %v143
    %v145 = vlaneseq
    %v146 = vshrl.u32 %v145, 7
    %v147 = vsub.s32 5, %v146
    %v148 = vrot.slane %v123, %v147
    %v173 = vunpack.c.l.b16 %v105
    %v174 = vunpack.c.h.b16 %v105
    %v175 = vunpack.c.l.b16 %v106
    %v176 = vunpack.c.h.b16 %v106
    %v177 = vunpack.c.l.b16 %v107
    %v178 = vunpack.c.h.b16 %v107
    %v179 = vunpack.c.l.b16 %v108
    %v180 = vunpack.c.h.b16 %v108
    %v181 = vunpack.c.l.b16 %v109
    %v182 = vunpack.c.h.b16 %v109
    %v183 = vunpack.c.l.b16 %v110
    %v184 = vunpack.c.h.b16 %v110
    %v185 = vunpack.c.l.b16 %v111
    %v186 = vunpack.c.h.b16 %v111
    %v187 = vunpack.c.l.b16 %v112
    %v188 = vunpack.c.h.b16 %v112
    %v189 = vunpack.c.l.b16 %v113
    %v190 = vunpack.c.h.b16 %v113
    %v191 = vunpack.c.l.b16 %v114
    %v192 = vunpack.c.h.b16 %v114
    %v193 = vunpack.c.l.b16 %v115
    %v194 = vunpack.c.h.b16 %v115
    %v195 = vunpack.c.l.b16 %v116
    %v196 = vunpack.c.h.b16 %v116
    %v197 = vunpack.c.l.b16 %v117
    %v198 = vunpack.c.h.b16 %v117
    %v199 = vunpack.c.l.b16 %v118
    %v200 = vunpack.c.h.b16 %v118
    %v201 = vunpack.c.l.b16 %v119
    %v202 = vunpack.c.h.b16 %v119
    %v203 = vunpack.c.l.b16 %v120
    %v204 = vunpack.c.h.b16 %v120
    %v205 = vunpack.c.l.b16 %v121
    %v206 = vunpack.c.h.b16 %v121
    %v207 = vunpack.c.l.b16 %v122
    %v208 = vunpack.c.h.b16 %v122
    %v209 = vpack.c.b16 %v179, %v173
    %v210 = vpack.c.b16 %v180, %v174
    %v211 = vpack.c.b16 %v181, %v175
    %v212 = vpack.c.b16 %v182, %v176
    %v213 = vpack.c.b16 %v183, %v177
    %v214 = vpack.c.b16 %v184, %v178
    %v215 = vpack.c.b16 %v191, %v185
    %v216 = vpack.c.b16 %v192, %v186
    %v217 = vpack.c.b16 %v193, %v187
    %v218 = vpack.c.b16 %v194, %v188
    %v219 = vpack.c.b16 %v195, %v189
    %v220 = vpack.c.b16 %v196, %v190
    %v221 = vpack.c.b16 %v203, %v197
    %v222 = vpack.c.b16 %v204, %v198
    %v223 = vpack.c.b16 %v205, %v199
    %v224 = vpack.c.b16 %v206, %v200
    %v225 = vpack.c.b16 %v207, %v201
    %v226 = vpack.c.b16 %v208, %v202
    %vm239 = vcmask 334848
    %v241 = vsel %vm239, %v104, 0
    %vm243 = vcmask 1043456
    %vm244 = vcmask 1044480
    %v245 = vsel %vm243, 4294967295, 65535
    %v246 = vsel %vm244, %v245, 0
    %v248 = vand.u32 %v221, %v246
    %v251 = vand.u32 %v222, %v246
    %v254 = vand.u32 %v223, %v246
    %v257 = vand.u32 %v224, %v246
    %v260 = vand.u32 %v225, %v246
    %v263 = vand.u32 %v226, %v246
    %265 = vmatprep.subr.bf16.mxu0 0
    %266 = vmatpush1.bf16.msra.mxu0 0
    %267 = vmatprep.subr.bf16.mxu0 0
    %268 = vmatpush1.bf16.msra.mxu0 0
    %269 = vmatprep.subr.bf16.mxu0 0
    %270 = vmatpush1.bf16.msra.mxu0 0
    %271 = vmatprep.subr.bf16.mxu0 0
    %272 = vmatpush1.bf16.msra.mxu0 0
    %273 = vmatprep.subr.bf16.mxu0 0
    %274 = vmatpush1.bf16.msra.mxu0 0
    %275 = vmatprep.subr.bf16.mxu0 %v251
    %276 = vmatpush1.bf16.msra.mxu0 %v248
    %277 = vmatprep.subr.bf16.mxu0 %v216
    %278 = vmatpush1.bf16.msra.mxu0 %v215
    %279 = vmatprep.subr.bf16.mxu0 %v210
    %280 = vmatpush1.bf16.msra.mxu0 %v209
    %281 = vmatprep.subr.bf16.mxu0 0
    %282 = vmatpush2.bf16.msra.mxu0 0
    %283 = vmatprep.subr.bf16.mxu0 0
    %284 = vmatpush2.bf16.msra.mxu0 0
    %285 = vmatprep.subr.bf16.mxu0 0
    %286 = vmatpush2.bf16.msra.mxu0 0
    %287 = vmatprep.subr.bf16.mxu0 0
    %288 = vmatpush2.bf16.msra.mxu0 0
    %289 = vmatprep.subr.bf16.mxu0 0
    %290 = vmatpush2.bf16.msra.mxu0 0
    %291 = vmatprep.subr.bf16.mxu0 0
    %292 = vmatpush2.bf16.msra.mxu0 0
    %293 = vmatprep.subr.bf16.mxu0 0
    %294 = vmatpush2.bf16.msra.mxu0 0
    %295 = vmatprep.subr.bf16.mxu0 0
    %296 = vmatpush2.bf16.msra.mxu0 0
    %297 = vmatprep.mubr.bf16.mxu0 0
    %298 = vmatmul.mubr.bf16.gmra.mxu0 %v241
    %v299 = vpop.f32.mrf.mxu0
    %v300 = vadd.f32 %v128, %v299
    %v301 = vpop.f32.mrf.mxu0
    %v302 = vadd.f32 %v132, %v301
    %v303 = vpop.f32.mrf.mxu0
    %v304 = vpop.f32.mrf.mxu0
    %305 = vdwg.mxu0
    %306 = vmatprep.subr.bf16.mxu0 0
    %307 = vmatpush1.bf16.msra.mxu0 0
    %308 = vmatprep.subr.bf16.mxu0 0
    %309 = vmatpush1.bf16.msra.mxu0 0
    %310 = vmatprep.subr.bf16.mxu0 0
    %311 = vmatpush1.bf16.msra.mxu0 0
    %312 = vmatprep.subr.bf16.mxu0 0
    %313 = vmatpush1.bf16.msra.mxu0 0
    %314 = vmatprep.subr.bf16.mxu0 0
    %315 = vmatpush1.bf16.msra.mxu0 0
    %316 = vmatprep.subr.bf16.mxu0 %v257
    %317 = vmatpush1.bf16.msra.mxu0 %v254
    %318 = vmatprep.subr.bf16.mxu0 %v218
    %319 = vmatpush1.bf16.msra.mxu0 %v217
    %320 = vmatprep.subr.bf16.mxu0 %v212
    %321 = vmatpush1.bf16.msra.mxu0 %v211
    %322 = vmatprep.subr.bf16.mxu0 0
    %323 = vmatpush2.bf16.msra.mxu0 0
    %324 = vmatprep.subr.bf16.mxu0 0
    %325 = vmatpush2.bf16.msra.mxu0 0
    %326 = vmatprep.subr.bf16.mxu0 0
    %327 = vmatpush2.bf16.msra.mxu0 0
    %328 = vmatprep.subr.bf16.mxu0 0
    %329 = vmatpush2.bf16.msra.mxu0 0
    %330 = vmatprep.subr.bf16.mxu0 0
    %331 = vmatpush2.bf16.msra.mxu0 0
    %332 = vmatprep.subr.bf16.mxu0 0
    %333 = vmatpush2.bf16.msra.mxu0 0
    %334 = vmatprep.subr.bf16.mxu0 0
    %335 = vmatpush2.bf16.msra.mxu0 0
    %336 = vmatprep.subr.bf16.mxu0 0
    %337 = vmatpush2.bf16.msra.mxu0 0
    %338 = vmatprep.mubr.bf16.mxu0 0
    %339 = vmatmul.mubr.bf16.gmra.mxu0 %v241
    %v340 = vpop.f32.mrf.mxu0
    %v341 = vadd.f32 %v136, %v340
    %v342 = vpop.f32.mrf.mxu0
    %v343 = vadd.f32 %v140, %v342
    %v344 = vpop.f32.mrf.mxu0
    %v345 = vpop.f32.mrf.mxu0
    %346 = vdwg.mxu0
    %347 = vmatprep.subr.bf16.mxu0 0
    %348 = vmatpush1.bf16.msra.mxu0 0
    %349 = vmatprep.subr.bf16.mxu0 0
    %350 = vmatpush1.bf16.msra.mxu0 0
    %351 = vmatprep.subr.bf16.mxu0 0
    %352 = vmatpush1.bf16.msra.mxu0 0
    %353 = vmatprep.subr.bf16.mxu0 0
    %354 = vmatpush1.bf16.msra.mxu0 0
    %355 = vmatprep.subr.bf16.mxu0 0
    %356 = vmatpush1.bf16.msra.mxu0 0
    %357 = vmatprep.subr.bf16.mxu0 %v263
    %358 = vmatpush1.bf16.msra.mxu0 %v260
    %359 = vmatprep.subr.bf16.mxu0 %v220
    %360 = vmatpush1.bf16.msra.mxu0 %v219
    %361 = vmatprep.subr.bf16.mxu0 %v214
    %362 = vmatpush1.bf16.msra.mxu0 %v213
    %363 = vmatprep.subr.bf16.mxu0 0
    %364 = vmatpush2.bf16.msra.mxu0 0
    %365 = vmatprep.subr.bf16.mxu0 0
    %366 = vmatpush2.bf16.msra.mxu0 0
    %367 = vmatprep.subr.bf16.mxu0 0
    %368 = vmatpush2.bf16.msra.mxu0 0
    %369 = vmatprep.subr.bf16.mxu0 0
    %370 = vmatpush2.bf16.msra.mxu0 0
    %371 = vmatprep.subr.bf16.mxu0 0
    %372 = vmatpush2.bf16.msra.mxu0 0
    %373 = vmatprep.subr.bf16.mxu0 0
    %374 = vmatpush2.bf16.msra.mxu0 0
    %375 = vmatprep.subr.bf16.mxu0 0
    %376 = vmatpush2.bf16.msra.mxu0 0
    %377 = vmatprep.subr.bf16.mxu0 0
    %378 = vmatpush2.bf16.msra.mxu0 0
    %379 = vmatprep.mubr.bf16.mxu0 0
    %380 = vmatmul.mubr.bf16.gmra.mxu0 %v241
    %v381 = vpop.f32.mrf.mxu0
    %v382 = vadd.f32 %v144, %v381
    %v383 = vpop.f32.mrf.mxu0
    %v384 = vadd.f32 %v148, %v383
    %v385 = vpop.f32.mrf.mxu0
    %v386 = vpop.f32.mrf.mxu0
    %387 = vdwg.mxu0
    %v388 = vmax.f32 %v300, 0.0
    %v389 = vmax.f32 %v302, 0.0
    %v390 = vmax.f32 %v341, 0.0
    %v391 = vmax.f32 %v343, 0.0
    %v392 = vmax.f32 %v382, 0.0
    %v393 = vmax.f32 %v384, 0.0
    %v394 = vpack.c.bf16 %v388, %v388
    %v395 = vpack.c.bf16 %v389, %v389
    %v396 = vpack.c.bf16 %v390, %v390
    %v397 = vpack.c.bf16 %v391, %v391
    %v398 = vld [vmem:[#allocation7] sm:$0xff]
    %v399 = vld [vmem:[#allocation7 + $0x8] sm:$0xff]
    %v400 = vld [vmem:[#allocation7 + $0x10] sm:$0xff]
    %v401 = vld [vmem:[#allocation7 + $0x18] sm:$0xff]
    %v402 = vld [vmem:[#allocation7 + $0x20] sm:$0xff]
    %v403 = vld [vmem:[#allocation7 + $0x28] sm:$0xff]
    %v404 = vld [vmem:[#allocation7 + $0x30] sm:$0xff]
    %v405 = vld [vmem:[#allocation7 + $0x38] sm:$0xff]
    %v406 = vld [vmem:[#allocation7 + $0x40] sm:$0xff]
    %v407 = vld [vmem:[#allocation7 + $0x48] sm:$0xff]
    %v408 = vld [vmem:[#allocation7 + $0x50] sm:$0xff]
    %v409 = vld [vmem:[#allocation7 + $0x58] sm:$0xff]
    %v410 = vld [vmem:[#allocation7 + $0x60] sm:$0xff]
    %v411 = vld [vmem:[#allocation7 + $0x68] sm:$0xff]
    %v412 = vld [vmem:[#allocation7 + $0x70] sm:$0xff]
    %v413 = vld [vmem:[#allocation7 + $0x78] sm:$0xff]
    %v414 = vld [vmem:[#allocation7 + $0x80] sm:$0xff]
    %v415 = vld [vmem:[#allocation7 + $0x88] sm:$0xff]
    %v416 = vld [vmem:[#allocation7 + $0x90] sm:$0xff]
    %v417 = vld [vmem:[#allocation7 + $0x98] sm:$0xff]
    %v418 = vld [vmem:[#allocation7 + $0xa0] sm:$0xff]
    %v419 = vld [vmem:[#allocation7 + $0xa8] sm:$0xff]
    %v420 = vld [vmem:[#allocation7 + $0xb0] sm:$0xff]
    %v421 = vld [vmem:[#allocation7 + $0xb8] sm:$0xff]
    %v422 = vld [vmem:[#allocation7 + $0xc0] sm:$0xff]
    %v423 = vld [vmem:[#allocation7 + $0xc8] sm:$0xff]
    %v424 = vld [vmem:[#allocation7 + $0xd0] sm:$0xff]
    %v425 = vld [vmem:[#allocation7 + $0xd8] sm:$0xff]
    %v426 = vld [vmem:[#allocation7 + $0xe0] sm:$0xff]
    %v427 = vld [vmem:[#allocation7 + $0xe8] sm:$0xff]
    %v428 = vld [vmem:[#allocation7 + $0xf0] sm:$0xff]
    %v429 = vld [vmem:[#allocation7 + $0xf8] sm:$0xff]
    %v430 = vld [vmem:[#allocation7 + $0x100] sm:$0xff]
    %v431 = vld [vmem:[#allocation7 + $0x108] sm:$0xff]
    %v432 = vld [vmem:[#allocation7 + $0x110] sm:$0xff]
    %v433 = vld [vmem:[#allocation7 + $0x118] sm:$0xff]
    %v434 = vld [vmem:[#allocation7 + $0x120] sm:$0xff]
    %v435 = vld [vmem:[#allocation7 + $0x128] sm:$0xff]
    %v436 = vld [vmem:[#allocation7 + $0x130] sm:$0xff]
    %v437 = vld [vmem:[#allocation7 + $0x138] sm:$0xff]
    %v438 = vld [vmem:[#allocation7 + $0x140] sm:$0xff]
    %v439 = vld [vmem:[#allocation7 + $0x148] sm:$0xff]
    %v440 = vld [vmem:[#allocation7 + $0x150] sm:$0xff]
    %v441 = vld [vmem:[#allocation7 + $0x158] sm:$0xff]
    %v442 = vld [vmem:[#allocation7 + $0x160] sm:$0xff]
    %v443 = vld [vmem:[#allocation7 + $0x168] sm:$0xff]
    %v444 = vld [vmem:[#allocation7 + $0x170] sm:$0xff]
    %v445 = vld [vmem:[#allocation7 + $0x178] sm:$0xff]
    %v446 = vld [vmem:[#allocation7 + $0x180] sm:$0xff]
    %v447 = vld [vmem:[#allocation7 + $0x188] sm:$0xff]
    %v448 = vld [vmem:[#allocation7 + $0x190] sm:$0xff]
    %v449 = vld [vmem:[#allocation7 + $0x198] sm:$0xff]
    %v450 = vld [vmem:[#allocation7 + $0x1a0] sm:$0xff]
    %v451 = vld [vmem:[#allocation7 + $0x1a8] sm:$0xff]
    %v452 = vld [vmem:[#allocation7 + $0x1b0] sm:$0xff]
    %v453 = vld [vmem:[#allocation7 + $0x1b8] sm:$0xff]
    %v454 = vld [vmem:[#allocation7 + $0x1c0] sm:$0xff]
    %v455 = vld [vmem:[#allocation7 + $0x1c8] sm:$0xff]
    %v456 = vld [vmem:[#allocation7 + $0x1d0] sm:$0xff]
    %v457 = vld [vmem:[#allocation7 + $0x1d8] sm:$0xff]
    %v458 = vld [vmem:[#allocation7 + $0x1e0] sm:$0xff]
    %v459 = vld [vmem:[#allocation7 + $0x1e8] sm:$0xff]
    %v460 = vld [vmem:[#allocation7 + $0x1f0] sm:$0xff]
    %v461 = vld [vmem:[#allocation7 + $0x1f8] sm:$0xff]
    %v462 = vld [vmem:[%s4] sm:$0x3]
    %v464 = vlaneseq
    %v465 = vshrl.u32 %v464, 7
    %v466 = vsub.s32 0, %v465
    %v467 = vrot.slane %v462, %v466
    %v468 = vlaneseq
    %v469 = vshrl.u32 %v468, 7
    %v470 = vsub.s32 1, %v469
    %v471 = vrot.slane %v462, %v470
    %v538 = vunpack.c.l.b16 %v398
    %v539 = vunpack.c.h.b16 %v398
    %v540 = vunpack.c.l.b16 %v399
    %v541 = vunpack.c.h.b16 %v399
    %v542 = vunpack.c.l.b16 %v400
    %v543 = vunpack.c.h.b16 %v400
    %v544 = vunpack.c.l.b16 %v401
    %v545 = vunpack.c.h.b16 %v401
    %v546 = vunpack.c.l.b16 %v402
    %v547 = vunpack.c.h.b16 %v402
    %v548 = vunpack.c.l.b16 %v403
    %v549 = vunpack.c.h.b16 %v403
    %v550 = vunpack.c.l.b16 %v404
    %v551 = vunpack.c.h.b16 %v404
    %v552 = vunpack.c.l.b16 %v405
    %v553 = vunpack.c.h.b16 %v405
    %v554 = vunpack.c.l.b16 %v406
    %v555 = vunpack.c.h.b16 %v406
    %v556 = vunpack.c.l.b16 %v407
    %v557 = vunpack.c.h.b16 %v407
    %v558 = vunpack.c.l.b16 %v408
    %v559 = vunpack.c.h.b16 %v408
    %v560 = vunpack.c.l.b16 %v409
    %v561 = vunpack.c.h.b16 %v409
    %v562 = vunpack.c.l.b16 %v410
    %v563 = vunpack.c.h.b16 %v410
    %v564 = vunpack.c.l.b16 %v411
    %v565 = vunpack.c.h.b16 %v411
    %v566 = vunpack.c.l.b16 %v412
    %v567 = vunpack.c.h.b16 %v412
    %v568 = vunpack.c.l.b16 %v413
    %v569 = vunpack.c.h.b16 %v413
    %v570 = vunpack.c.l.b16 %v414
    %v571 = vunpack.c.h.b16 %v414
    %v572 = vunpack.c.l.b16 %v415
    %v573 = vunpack.c.h.b16 %v415
    %v574 = vunpack.c.l.b16 %v416
    %v575 = vunpack.c.h.b16 %v416
    %v576 = vunpack.c.l.b16 %v417
    %v577 = vunpack.c.h.b16 %v417
    %v578 = vunpack.c.l.b16 %v418
    %v579 = vunpack.c.h.b16 %v418
    %v580 = vunpack.c.l.b16 %v419
    %v581 = vunpack.c.h.b16 %v419
    %v582 = vunpack.c.l.b16 %v420
    %v583 = vunpack.c.h.b16 %v420
    %v584 = vunpack.c.l.b16 %v421
    %v585 = vunpack.c.h.b16 %v421
    %v586 = vunpack.c.l.b16 %v422
    %v587 = vunpack.c.h.b16 %v422
    %v588 = vunpack.c.l.b16 %v423
    %v589 = vunpack.c.h.b16 %v423
    %v590 = vunpack.c.l.b16 %v424
    %v591 = vunpack.c.h.b16 %v424
    %v592 = vunpack.c.l.b16 %v425
    %v593 = vunpack.c.h.b16 %v425
    %v594 = vunpack.c.l.b16 %v426
    %v595 = vunpack.c.h.b16 %v426
    %v596 = vunpack.c.l.b16 %v427
    %v597 = vunpack.c.h.b16 %v427
    %v598 = vunpack.c.l.b16 %v428
    %v599 = vunpack.c.h.b16 %v428
    %v600 = vunpack.c.l.b16 %v429
    %v601 = vunpack.c.h.b16 %v429
    %v602 = vunpack.c.l.b16 %v430
    %v603 = vunpack.c.h.b16 %v430
    %v604 = vunpack.c.l.b16 %v431
    %v605 = vunpack.c.h.b16 %v431
    %v606 = vunpack.c.l.b16 %v432
    %v607 = vunpack.c.h.b16 %v432
    %v608 = vunpack.c.l.b16 %v433
    %v609 = vunpack.c.h.b16 %v433
    %v610 = vunpack.c.l.b16 %v434
    %v611 = vunpack.c.h.b16 %v434
    %v612 = vunpack.c.l.b16 %v435
    %v613 = vunpack.c.h.b16 %v435
    %v614 = vunpack.c.l.b16 %v436
    %v615 = vunpack.c.h.b16 %v436
    %v616 = vunpack.c.l.b16 %v437
    %v617 = vunpack.c.h.b16 %v437
    %v618 = vunpack.c.l.b16 %v438
    %v619 = vunpack.c.h.b16 %v438
    %v620 = vunpack.c.l.b16 %v439
    %v621 = vunpack.c.h.b16 %v439
    %v622 = vunpack.c.l.b16 %v440
    %v623 = vunpack.c.h.b16 %v440
    %v624 = vunpack.c.l.b16 %v441
    %v625 = vunpack.c.h.b16 %v441
    %v626 = vunpack.c.l.b16 %v442
    %v627 = vunpack.c.h.b16 %v442
    %v628 = vunpack.c.l.b16 %v443
    %v629 = vunpack.c.h.b16 %v443
    %v630 = vunpack.c.l.b16 %v444
    %v631 = vunpack.c.h.b16 %v444
    %v632 = vunpack.c.l.b16 %v445
    %v633 = vunpack.c.h.b16 %v445
    %v634 = vunpack.c.l.b16 %v446
    %v635 = vunpack.c.h.b16 %v446
    %v636 = vunpack.c.l.b16 %v447
    %v637 = vunpack.c.h.b16 %v447
    %v638 = vunpack.c.l.b16 %v448
    %v639 = vunpack.c.h.b16 %v448
    %v640 = vunpack.c.l.b16 %v449
    %v641 = vunpack.c.h.b16 %v449
    %v642 = vunpack.c.l.b16 %v450
    %v643 = vunpack.c.h.b16 %v450
    %v644 = vunpack.c.l.b16 %v451
    %v645 = vunpack.c.h.b16 %v451
    %v646 = vunpack.c.l.b16 %v452
    %v647 = vunpack.c.h.b16 %v452
    %v648 = vunpack.c.l.b16 %v453
    %v649 = vunpack.c.h.b16 %v453
    %v650 = vunpack.c.l.b16 %v454
    %v651 = vunpack.c.h.b16 %v454
    %v652 = vunpack.c.l.b16 %v455
    %v653 = vunpack.c.h.b16 %v455
    %v654 = vunpack.c.l.b16 %v456
    %v655 = vunpack.c.h.b16 %v456
    %v656 = vunpack.c.l.b16 %v457
    %v657 = vunpack.c.h.b16 %v457
    %v658 = vunpack.c.l.b16 %v458
    %v659 = vunpack.c.h.b16 %v458
    %v660 = vunpack.c.l.b16 %v459
    %v661 = vunpack.c.h.b16 %v459
    %v662 = vunpack.c.l.b16 %v460
    %v663 = vunpack.c.h.b16 %v460
    %v664 = vunpack.c.l.b16 %v461
    %v665 = vunpack.c.h.b16 %v461
    %v666 = vpack.c.b16 %v540, %v538
    %v667 = vpack.c.b16 %v541, %v539
    %v668 = vpack.c.b16 %v544, %v542
    %v669 = vpack.c.b16 %v545, %v543
    %v670 = vpack.c.b16 %v548, %v546
    %v671 = vpack.c.b16 %v549, %v547
    %v672 = vpack.c.b16 %v552, %v550
    %v673 = vpack.c.b16 %v553, %v551
    %v674 = vpack.c.b16 %v556, %v554
    %v675 = vpack.c.b16 %v557, %v555
    %v676 = vpack.c.b16 %v560, %v558
    %v677 = vpack.c.b16 %v561, %v559
    %v678 = vpack.c.b16 %v564, %v562
    %v679 = vpack.c.b16 %v565, %v563
    %v680 = vpack.c.b16 %v568, %v566
    %v681 = vpack.c.b16 %v569, %v567
    %v682 = vpack.c.b16 %v572, %v570
    %v683 = vpack.c.b16 %v573, %v571
    %v684 = vpack.c.b16 %v576, %v574
    %v685 = vpack.c.b16 %v577, %v575
    %v686 = vpack.c.b16 %v580, %v578
    %v687 = vpack.c.b16 %v581, %v579
    %v688 = vpack.c.b16 %v584, %v582
    %v689 = vpack.c.b16 %v585, %v583
    %v690 = vpack.c.b16 %v588, %v586
    %v691 = vpack.c.b16 %v589, %v587
    %v692 = vpack.c.b16 %v592, %v590
    %v693 = vpack.c.b16 %v593, %v591
    %v694 = vpack.c.b16 %v596, %v594
    %v695 = vpack.c.b16 %v597, %v595
    %v696 = vpack.c.b16 %v600, %v598
    %v697 = vpack.c.b16 %v601, %v599
    %v698 = vpack.c.b16 %v604, %v602
    %v699 = vpack.c.b16 %v605, %v603
    %v700 = vpack.c.b16 %v608, %v606
    %v701 = vpack.c.b16 %v609, %v607
    %v702 = vpack.c.b16 %v612, %v610
    %v703 = vpack.c.b16 %v613, %v611
    %v704 = vpack.c.b16 %v616, %v614
    %v705 = vpack.c.b16 %v617, %v615
    %v706 = vpack.c.b16 %v620, %v618
    %v707 = vpack.c.b16 %v621, %v619
    %v708 = vpack.c.b16 %v624, %v622
    %v709 = vpack.c.b16 %v625, %v623
    %v710 = vpack.c.b16 %v628, %v626
    %v711 = vpack.c.b16 %v629, %v627
    %v712 = vpack.c.b16 %v632, %v630
    %v713 = vpack.c.b16 %v633, %v631
    %v714 = vpack.c.b16 %v636, %v634
    %v715 = vpack.c.b16 %v637, %v635
    %v716 = vpack.c.b16 %v640, %v638
    %v717 = vpack.c.b16 %v641, %v639
    %v718 = vpack.c.b16 %v644, %v642
    %v719 = vpack.c.b16 %v645, %v643
    %v720 = vpack.c.b16 %v648, %v646
    %v721 = vpack.c.b16 %v649, %v647
    %v722 = vpack.c.b16 %v652, %v650
    %v723 = vpack.c.b16 %v653, %v651
    %v724 = vpack.c.b16 %v656, %v654
    %v725 = vpack.c.b16 %v657, %v655
    %v726 = vpack.c.b16 %v660, %v658
    %v727 = vpack.c.b16 %v661, %v659
    %v728 = vpack.c.b16 %v664, %v662
    %v729 = vpack.c.b16 %v665, %v663
    %794 = vmatprep.subr.bf16.mxu0 %v681
    %795 = vmatpush1.bf16.msra.mxu0 %v680
    %796 = vmatprep.subr.bf16.mxu0 %v679
    %797 = vmatpush1.bf16.msra.mxu0 %v678
    %798 = vmatprep.subr.bf16.mxu0 %v677
    %799 = vmatpush1.bf16.msra.mxu0 %v676
    %800 = vmatprep.subr.bf16.mxu0 %v675
    %801 = vmatpush1.bf16.msra.mxu0 %v674
    %802 = vmatprep.subr.bf16.mxu0 %v673
    %803 = vmatpush1.bf16.msra.mxu0 %v672
    %804 = vmatprep.subr.bf16.mxu0 %v671
    %805 = vmatpush1.bf16.msra.mxu0 %v670
    %806 = vmatprep.subr.bf16.mxu0 %v669
    %807 = vmatpush1.bf16.msra.mxu0 %v668
    %808 = vmatprep.subr.bf16.mxu0 %v667
    %809 = vmatpush1.bf16.msra.mxu0 %v666
    %810 = vmatprep.subr.bf16.mxu0 %v697
    %811 = vmatpush2.bf16.msra.mxu0 %v696
    %812 = vmatprep.subr.bf16.mxu0 %v695
    %813 = vmatpush2.bf16.msra.mxu0 %v694
    %814 = vmatprep.subr.bf16.mxu0 %v693
    %815 = vmatpush2.bf16.msra.mxu0 %v692
    %816 = vmatprep.subr.bf16.mxu0 %v691
    %817 = vmatpush2.bf16.msra.mxu0 %v690
    %818 = vmatprep.subr.bf16.mxu0 %v689
    %819 = vmatpush2.bf16.msra.mxu0 %v688
    %820 = vmatprep.subr.bf16.mxu0 %v687
    %821 = vmatpush2.bf16.msra.mxu0 %v686
    %822 = vmatprep.subr.bf16.mxu0 %v685
    %823 = vmatpush2.bf16.msra.mxu0 %v684
    %824 = vmatprep.subr.bf16.mxu0 %v683
    %825 = vmatpush2.bf16.msra.mxu0 %v682
    %826 = vmatprep.mubr.bf16.mxu0 %v395
    %827 = vmatmul.mubr.bf16.gmra.mxu0 %v394
    %v828 = vpop.f32.mrf.mxu0
    %v829 = vadd.f32 %v467, %v828
    %v830 = vpop.f32.mrf.mxu0
    %v831 = vadd.f32 %v471, %v830
    %v832 = vpop.f32.mrf.mxu0
    %v833 = vpop.f32.mrf.mxu0
    %834 = vdwg.mxu0
    %835 = vmatprep.subr.bf16.mxu0 %v713
    %836 = vmatpush1.bf16.msra.mxu0 %v712
    %837 = vmatprep.subr.bf16.mxu0 %v711
    %838 = vmatpush1.bf16.msra.mxu0 %v710
    %839 = vmatprep.subr.bf16.mxu0 %v709
    %840 = vmatpush1.bf16.msra.mxu0 %v708
    %841 = vmatprep.subr.bf16.mxu0 %v707
    %842 = vmatpush1.bf16.msra.mxu0 %v706
    %843 = vmatprep.subr.bf16.mxu0 %v705
    %844 = vmatpush1.bf16.msra.mxu0 %v704
    %845 = vmatprep.subr.bf16.mxu0 %v703
    %846 = vmatpush1.bf16.msra.mxu0 %v702
    %847 = vmatprep.subr.bf16.mxu0 %v701
    %848 = vmatpush1.bf16.msra.mxu0 %v700
    %849 = vmatprep.subr.bf16.mxu0 %v699
    %850 = vmatpush1.bf16.msra.mxu0 %v698
    %851 = vmatprep.subr.bf16.mxu0 %v729
    %852 = vmatpush2.bf16.msra.mxu0 %v728
    %853 = vmatprep.subr.bf16.mxu0 %v727
    %854 = vmatpush2.bf16.msra.mxu0 %v726
    %855 = vmatprep.subr.bf16.mxu0 %v725
    %856 = vmatpush2.bf16.msra.mxu0 %v724
    %857 = vmatprep.subr.bf16.mxu0 %v723
    %858 = vmatpush2.bf16.msra.mxu0 %v722
    %859 = vmatprep.subr.bf16.mxu0 %v721
    %860 = vmatpush2.bf16.msra.mxu0 %v720
    %861 = vmatprep.subr.bf16.mxu0 %v719
    %862 = vmatpush2.bf16.msra.mxu0 %v718
    %863 = vmatprep.subr.bf16.mxu0 %v717
    %864 = vmatpush2.bf16.msra.mxu0 %v716
    %865 = vmatprep.subr.bf16.mxu0 %v715
    %866 = vmatpush2.bf16.msra.mxu0 %v714
    %867 = vmatprep.mubr.bf16.mxu0 %v397
    %868 = vmatmul.mubr.bf16.gmra.mxu0 %v396
    %v869 = vpop.f32.mrf.mxu0
    %v870 = vadd.f32 %v829, %v869
    %v871 = vpop.f32.mrf.mxu0
    %v872 = vadd.f32 %v831, %v871
    %v873 = vpop.f32.mrf.mxu0
    %v874 = vpop.f32.mrf.mxu0
    %875 = vdwg.mxu0
    %v876 = vmax.f32 %v870, 0.0
    %v877 = vmax.f32 %v872, 0.0
    %v878 = vpack.c.bf16 %v876, %v876
    %v879 = vpack.c.bf16 %v877, %v877
    %v880 = vld [vmem:[#allocation8] sm:$0xff]
    %v881 = vld [vmem:[#allocation8 + $0x8] sm:$0xff]
    %v882 = vld [vmem:[#allocation8 + $0x10] sm:$0xff]
    %v883 = vld [vmem:[#allocation8 + $0x18] sm:$0xff]
    %v884 = vld [vmem:[#allocation8 + $0x20] sm:$0xff]
    %v885 = vld [vmem:[#allocation8 + $0x28] sm:$0xff]
    %v886 = vld [vmem:[#allocation8 + $0x30] sm:$0xff]
    %v887 = vld [vmem:[#allocation8 + $0x38] sm:$0xff]
    %v888 = vld [vmem:[#allocation8 + $0x40] sm:$0xff]
    %v889 = vld [vmem:[#allocation8 + $0x48] sm:$0xff]
    %v890 = vld [vmem:[#allocation8 + $0x50] sm:$0xff]
    %v891 = vld [vmem:[#allocation8 + $0x58] sm:$0xff]
    %v892 = vld [vmem:[#allocation8 + $0x60] sm:$0xff]
    %v893 = vld [vmem:[#allocation8 + $0x68] sm:$0xff]
    %v894 = vld [vmem:[#allocation8 + $0x70] sm:$0xff]
    %v895 = vld [vmem:[#allocation8 + $0x78] sm:$0xff]
    %v896 = vld [vmem:[#allocation8 + $0x80] sm:$0xff]
    %v897 = vld [vmem:[#allocation8 + $0x88] sm:$0xff]
    %v898 = vld [vmem:[#allocation8 + $0x90] sm:$0xff]
    %v899 = vld [vmem:[#allocation8 + $0x98] sm:$0xff]
    %v900 = vld [vmem:[#allocation8 + $0xa0] sm:$0xff]
    %v901 = vld [vmem:[#allocation8 + $0xa8] sm:$0xff]
    %v902 = vld [vmem:[#allocation8 + $0xb0] sm:$0xff]
    %v903 = vld [vmem:[#allocation8 + $0xb8] sm:$0xff]
    %v904 = vld [vmem:[#allocation8 + $0xc0] sm:$0xff]
    %v905 = vld [vmem:[#allocation8 + $0xc8] sm:$0xff]
    %v906 = vld [vmem:[#allocation8 + $0xd0] sm:$0xff]
    %v907 = vld [vmem:[#allocation8 + $0xd8] sm:$0xff]
    %v908 = vld [vmem:[#allocation8 + $0xe0] sm:$0xff]
    %v909 = vld [vmem:[#allocation8 + $0xe8] sm:$0xff]
    %v910 = vld [vmem:[#allocation8 + $0xf0] sm:$0xff]
    %v911 = vld [vmem:[#allocation8 + $0xf8] sm:$0xff]
    %v912 = vpack.c.bf16 %v392, %v392
    %v913 = vpack.c.bf16 %v393, %v393
    %v914 = vld [vmem:[#allocation10] sm:$0xff]
    %v915 = vld [vmem:[#allocation10 + $0x8] sm:$0xff]
    %v916 = vld [vmem:[#allocation10 + $0x10] sm:$0xff]
    %v917 = vld [vmem:[#allocation10 + $0x18] sm:$0xff]
    %v918 = vld [vmem:[#allocation10 + $0x20] sm:$0xff]
    %v919 = vld [vmem:[#allocation10 + $0x28] sm:$0xff]
    %v920 = vld [vmem:[#allocation10 + $0x30] sm:$0xff]
    %v921 = vld [vmem:[#allocation10 + $0x38] sm:$0xff]
    %v922 = vld [vmem:[#allocation10 + $0x40] sm:$0xff]
    %v923 = vld [vmem:[#allocation10 + $0x48] sm:$0xff]
    %v924 = vld [vmem:[#allocation10 + $0x50] sm:$0xff]
    %v925 = vld [vmem:[#allocation10 + $0x58] sm:$0xff]
    %v926 = vld [vmem:[#allocation10 + $0x60] sm:$0xff]
    %v927 = vld [vmem:[#allocation10 + $0x68] sm:$0xff]
    %v928 = vld [vmem:[#allocation10 + $0x70] sm:$0xff]
    %v929 = vld [vmem:[#allocation10 + $0x78] sm:$0xff]
    %v930 = vld [vmem:[#allocation10 + $0x80] sm:$0xff]
    %v931 = vld [vmem:[#allocation10 + $0x88] sm:$0xff]
    %v932 = vld [vmem:[#allocation10 + $0x90] sm:$0xff]
    %v933 = vld [vmem:[#allocation10 + $0x98] sm:$0xff]
    %v934 = vld [vmem:[#allocation10 + $0xa0] sm:$0xff]
    %v935 = vld [vmem:[#allocation10 + $0xa8] sm:$0xff]
    %v936 = vld [vmem:[#allocation10 + $0xb0] sm:$0xff]
    %v937 = vld [vmem:[#allocation10 + $0xb8] sm:$0xff]
    %v938 = vld [vmem:[#allocation10 + $0xc0] sm:$0xff]
    %v939 = vld [vmem:[#allocation10 + $0xc8] sm:$0xff]
    %v940 = vld [vmem:[#allocation10 + $0xd0] sm:$0xff]
    %v941 = vld [vmem:[#allocation10 + $0xd8] sm:$0xff]
    %v942 = vld [vmem:[#allocation10 + $0xe0] sm:$0xff]
    %v943 = vld [vmem:[#allocation10 + $0xe8] sm:$0xff]
    %v944 = vld [vmem:[#allocation10 + $0xf0] sm:$0xff]
    %v945 = vld [vmem:[#allocation10 + $0xf8] sm:$0xff]
    %v978 = vunpack.c.l.b16 %v914
    %v979 = vunpack.c.h.b16 %v914
    %v980 = vunpack.c.l.b16 %v915
    %v981 = vunpack.c.h.b16 %v915
    %v982 = vunpack.c.l.b16 %v916
    %v983 = vunpack.c.h.b16 %v916
    %v984 = vunpack.c.l.b16 %v917
    %v985 = vunpack.c.h.b16 %v917
    %v986 = vunpack.c.l.b16 %v918
    %v987 = vunpack.c.h.b16 %v918
    %v988 = vunpack.c.l.b16 %v919
    %v989 = vunpack.c.h.b16 %v919
    %v990 = vunpack.c.l.b16 %v920
    %v991 = vunpack.c.h.b16 %v920
    %v992 = vunpack.c.l.b16 %v921
    %v993 = vunpack.c.h.b16 %v921
    %v994 = vunpack.c.l.b16 %v922
    %v995 = vunpack.c.h.b16 %v922
    %v996 = vunpack.c.l.b16 %v923
    %v997 = vunpack.c.h.b16 %v923
    %v998 = vunpack.c.l.b16 %v924
    %v999 = vunpack.c.h.b16 %v924
    %v1000 = vunpack.c.l.b16 %v925
    %v1001 = vunpack.c.h.b16 %v925
    %v1002 = vunpack.c.l.b16 %v926
    %v1003 = vunpack.c.h.b16 %v926
    %v1004 = vunpack.c.l.b16 %v927
    %v1005 = vunpack.c.h.b16 %v927
    %v1006 = vunpack.c.l.b16 %v928
    %v1007 = vunpack.c.h.b16 %v928
    %v1008 = vunpack.c.l.b16 %v929
    %v1009 = vunpack.c.h.b16 %v929
    %v1010 = vunpack.c.l.b16 %v930
    %v1011 = vunpack.c.h.b16 %v930
    %v1012 = vunpack.c.l.b16 %v931
    %v1013 = vunpack.c.h.b16 %v931
    %v1014 = vunpack.c.l.b16 %v932
    %v1015 = vunpack.c.h.b16 %v932
    %v1016 = vunpack.c.l.b16 %v933
    %v1017 = vunpack.c.h.b16 %v933
    %v1018 = vunpack.c.l.b16 %v934
    %v1019 = vunpack.c.h.b16 %v934
    %v1020 = vunpack.c.l.b16 %v935
    %v1021 = vunpack.c.h.b16 %v935
    %v1022 = vunpack.c.l.b16 %v936
    %v1023 = vunpack.c.h.b16 %v936
    %v1024 = vunpack.c.l.b16 %v937
    %v1025 = vunpack.c.h.b16 %v937
    %v1026 = vunpack.c.l.b16 %v938
    %v1027 = vunpack.c.h.b16 %v938
    %v1028 = vunpack.c.l.b16 %v939
    %v1029 = vunpack.c.h.b16 %v939
    %v1030 = vunpack.c.l.b16 %v940
    %v1031 = vunpack.c.h.b16 %v940
    %v1032 = vunpack.c.l.b16 %v941
    %v1033 = vunpack.c.h.b16 %v941
    %v1034 = vunpack.c.l.b16 %v942
    %v1035 = vunpack.c.h.b16 %v942
    %v1036 = vunpack.c.l.b16 %v943
    %v1037 = vunpack.c.h.b16 %v943
    %v1038 = vunpack.c.l.b16 %v944
    %v1039 = vunpack.c.h.b16 %v944
    %v1040 = vunpack.c.l.b16 %v945
    %v1041 = vunpack.c.h.b16 %v945
    %v1042 = vpack.c.b16 %v980, %v978
    %v1043 = vpack.c.b16 %v981, %v979
    %v1044 = vpack.c.b16 %v984, %v982
    %v1045 = vpack.c.b16 %v985, %v983
    %v1046 = vpack.c.b16 %v988, %v986
    %v1047 = vpack.c.b16 %v989, %v987
    %v1048 = vpack.c.b16 %v992, %v990
    %v1049 = vpack.c.b16 %v993, %v991
    %v1050 = vpack.c.b16 %v996, %v994
    %v1051 = vpack.c.b16 %v997, %v995
    %v1052 = vpack.c.b16 %v1000, %v998
    %v1053 = vpack.c.b16 %v1001, %v999
    %v1054 = vpack.c.b16 %v1004, %v1002
    %v1055 = vpack.c.b16 %v1005, %v1003
    %v1056 = vpack.c.b16 %v1008, %v1006
    %v1057 = vpack.c.b16 %v1009, %v1007
    %v1058 = vpack.c.b16 %v1012, %v1010
    %v1059 = vpack.c.b16 %v1013, %v1011
    %v1060 = vpack.c.b16 %v1016, %v1014
    %v1061 = vpack.c.b16 %v1017, %v1015
    %v1062 = vpack.c.b16 %v1020, %v1018
    %v1063 = vpack.c.b16 %v1021, %v1019
    %v1064 = vpack.c.b16 %v1024, %v1022
    %v1065 = vpack.c.b16 %v1025, %v1023
    %v1066 = vpack.c.b16 %v1028, %v1026
    %v1067 = vpack.c.b16 %v1029, %v1027
    %v1068 = vpack.c.b16 %v1032, %v1030
    %v1069 = vpack.c.b16 %v1033, %v1031
    %v1070 = vpack.c.b16 %v1036, %v1034
    %v1071 = vpack.c.b16 %v1037, %v1035
    %v1072 = vpack.c.b16 %v1040, %v1038
    %v1073 = vpack.c.b16 %v1041, %v1039
    %1106 = vmatprep.subr.bf16.mxu0 %v1057
    %1107 = vmatpush1.bf16.msra.mxu0 %v1056
    %1108 = vmatprep.subr.bf16.mxu0 %v1055
    %1109 = vmatpush1.bf16.msra.mxu0 %v1054
    %1110 = vmatprep.subr.bf16.mxu0 %v1053
    %1111 = vmatpush1.bf16.msra.mxu0 %v1052
    %1112 = vmatprep.subr.bf16.mxu0 %v1051
    %1113 = vmatpush1.bf16.msra.mxu0 %v1050
    %1114 = vmatprep.subr.bf16.mxu0 %v1049
    %1115 = vmatpush1.bf16.msra.mxu0 %v1048
    %1116 = vmatprep.subr.bf16.mxu0 %v1047
    %1117 = vmatpush1.bf16.msra.mxu0 %v1046
    %1118 = vmatprep.subr.bf16.mxu0 %v1045
    %1119 = vmatpush1.bf16.msra.mxu0 %v1044
    %1120 = vmatprep.subr.bf16.mxu0 %v1043
    %1121 = vmatpush1.bf16.msra.mxu0 %v1042
    %1122 = vmatprep.subr.bf16.mxu0 %v1073
    %1123 = vmatpush2.bf16.msra.mxu0 %v1072
    %1124 = vmatprep.subr.bf16.mxu0 %v1071
    %1125 = vmatpush2.bf16.msra.mxu0 %v1070
    %1126 = vmatprep.subr.bf16.mxu0 %v1069
    %1127 = vmatpush2.bf16.msra.mxu0 %v1068
    %1128 = vmatprep.subr.bf16.mxu0 %v1067
    %1129 = vmatpush2.bf16.msra.mxu0 %v1066
    %1130 = vmatprep.subr.bf16.mxu0 %v1065
    %1131 = vmatpush2.bf16.msra.mxu0 %v1064
    %1132 = vmatprep.subr.bf16.mxu0 %v1063
    %1133 = vmatpush2.bf16.msra.mxu0 %v1062
    %1134 = vmatprep.subr.bf16.mxu0 %v1061
    %1135 = vmatpush2.bf16.msra.mxu0 %v1060
    %1136 = vmatprep.subr.bf16.mxu0 %v1059
    %1137 = vmatpush2.bf16.msra.mxu0 %v1058
    %1138 = vmatprep.mubr.bf16.mxu0 %v913
    %1139 = vmatmul.mubr.bf16.gmra.mxu0 %v912
    %v1140 = vpop.f32.mrf.mxu0
    %v1141 = vadd.f32 0.0, %v1140
    %v1142 = vpop.f32.mrf.mxu0
    %v1143 = vadd.f32 0.0, %v1142
    %v1144 = vpop.f32.mrf.mxu0
    %v1145 = vpop.f32.mrf.mxu0
    %1146 = vdwg.mxu0
    %v1179 = vunpack.c.l.b16 %v880
    %v1180 = vunpack.c.h.b16 %v880
    %v1181 = vunpack.c.l.b16 %v881
    %v1182 = vunpack.c.h.b16 %v881
    %v1183 = vunpack.c.l.b16 %v882
    %v1184 = vunpack.c.h.b16 %v882
    %v1185 = vunpack.c.l.b16 %v883
    %v1186 = vunpack.c.h.b16 %v883
    %v1187 = vunpack.c.l.b16 %v884
    %v1188 = vunpack.c.h.b16 %v884
    %v1189 = vunpack.c.l.b16 %v885
    %v1190 = vunpack.c.h.b16 %v885
    %v1191 = vunpack.c.l.b16 %v886
    %v1192 = vunpack.c.h.b16 %v886
    %v1193 = vunpack.c.l.b16 %v887
    %v1194 = vunpack.c.h.b16 %v887
    %v1195 = vunpack.c.l.b16 %v888
    %v1196 = vunpack.c.h.b16 %v888
    %v1197 = vunpack.c.l.b16 %v889
    %v1198 = vunpack.c.h.b16 %v889
    %v1199 = vunpack.c.l.b16 %v890
    %v1200 = vunpack.c.h.b16 %v890
    %v1201 = vunpack.c.l.b16 %v891
    %v1202 = vunpack.c.h.b16 %v891
    %v1203 = vunpack.c.l.b16 %v892
    %v1204 = vunpack.c.h.b16 %v892
    %v1205 = vunpack.c.l.b16 %v893
    %v1206 = vunpack.c.h.b16 %v893
    %v1207 = vunpack.c.l.b16 %v894
    %v1208 = vunpack.c.h.b16 %v894
    %v1209 = vunpack.c.l.b16 %v895
    %v1210 = vunpack.c.h.b16 %v895
    %v1211 = vunpack.c.l.b16 %v896
    %v1212 = vunpack.c.h.b16 %v896
    %v1213 = vunpack.c.l.b16 %v897
    %v1214 = vunpack.c.h.b16 %v897
    %v1215 = vunpack.c.l.b16 %v898
    %v1216 = vunpack.c.h.b16 %v898
    %v1217 = vunpack.c.l.b16 %v899
    %v1218 = vunpack.c.h.b16 %v899
    %v1219 = vunpack.c.l.b16 %v900
    %v1220 = vunpack.c.h.b16 %v900
    %v1221 = vunpack.c.l.b16 %v901
    %v1222 = vunpack.c.h.b16 %v901
    %v1223 = vunpack.c.l.b16 %v902
    %v1224 = vunpack.c.h.b16 %v902
    %v1225 = vunpack.c.l.b16 %v903
    %v1226 = vunpack.c.h.b16 %v903
    %v1227 = vunpack.c.l.b16 %v904
    %v1228 = vunpack.c.h.b16 %v904
    %v1229 = vunpack.c.l.b16 %v905
    %v1230 = vunpack.c.h.b16 %v905
    %v1231 = vunpack.c.l.b16 %v906
    %v1232 = vunpack.c.h.b16 %v906
    %v1233 = vunpack.c.l.b16 %v907
    %v1234 = vunpack.c.h.b16 %v907
    %v1235 = vunpack.c.l.b16 %v908
    %v1236 = vunpack.c.h.b16 %v908
    %v1237 = vunpack.c.l.b16 %v909
    %v1238 = vunpack.c.h.b16 %v909
    %v1239 = vunpack.c.l.b16 %v910
    %v1240 = vunpack.c.h.b16 %v910
    %v1241 = vunpack.c.l.b16 %v911
    %v1242 = vunpack.c.h.b16 %v911
    %v1243 = vpack.c.b16 %v1181, %v1179
    %v1244 = vpack.c.b16 %v1182, %v1180
    %v1245 = vpack.c.b16 %v1185, %v1183
    %v1246 = vpack.c.b16 %v1186, %v1184
    %v1247 = vpack.c.b16 %v1189, %v1187
    %v1248 = vpack.c.b16 %v1190, %v1188
    %v1249 = vpack.c.b16 %v1193, %v1191
    %v1250 = vpack.c.b16 %v1194, %v1192
    %v1251 = vpack.c.b16 %v1197, %v1195
    %v1252 = vpack.c.b16 %v1198, %v1196
    %v1253 = vpack.c.b16 %v1201, %v1199
    %v1254 = vpack.c.b16 %v1202, %v1200
    %v1255 = vpack.c.b16 %v1205, %v1203
    %v1256 = vpack.c.b16 %v1206, %v1204
    %v1257 = vpack.c.b16 %v1209, %v1207
    %v1258 = vpack.c.b16 %v1210, %v1208
    %v1259 = vpack.c.b16 %v1213, %v1211
    %v1260 = vpack.c.b16 %v1214, %v1212
    %v1261 = vpack.c.b16 %v1217, %v1215
    %v1262 = vpack.c.b16 %v1218, %v1216
    %v1263 = vpack.c.b16 %v1221, %v1219
    %v1264 = vpack.c.b16 %v1222, %v1220
    %v1265 = vpack.c.b16 %v1225, %v1223
    %v1266 = vpack.c.b16 %v1226, %v1224
    %v1267 = vpack.c.b16 %v1229, %v1227
    %v1268 = vpack.c.b16 %v1230, %v1228
    %v1269 = vpack.c.b16 %v1233, %v1231
    %v1270 = vpack.c.b16 %v1234, %v1232
    %v1271 = vpack.c.b16 %v1237, %v1235
    %v1272 = vpack.c.b16 %v1238, %v1236
    %v1273 = vpack.c.b16 %v1241, %v1239
    %v1274 = vpack.c.b16 %v1242, %v1240
    %1307 = vmatprep.subr.bf16.mxu0 %v1258
    %1308 = vmatpush1.bf16.msra.mxu0 %v1257
    %1309 = vmatprep.subr.bf16.mxu0 %v1256
    %1310 = vmatpush1.bf16.msra.mxu0 %v1255
    %1311 = vmatprep.subr.bf16.mxu0 %v1254
    %1312 = vmatpush1.bf16.msra.mxu0 %v1253
    %1313 = vmatprep.subr.bf16.mxu0 %v1252
    %1314 = vmatpush1.bf16.msra.mxu0 %v1251
    %1315 = vmatprep.subr.bf16.mxu0 %v1250
    %1316 = vmatpush1.bf16.msra.mxu0 %v1249
    %1317 = vmatprep.subr.bf16.mxu0 %v1248
    %1318 = vmatpush1.bf16.msra.mxu0 %v1247
    %1319 = vmatprep.subr.bf16.mxu0 %v1246
    %1320 = vmatpush1.bf16.msra.mxu0 %v1245
    %1321 = vmatprep.subr.bf16.mxu0 %v1244
    %1322 = vmatpush1.bf16.msra.mxu0 %v1243
    %1323 = vmatprep.subr.bf16.mxu0 %v1274
    %1324 = vmatpush2.bf16.msra.mxu0 %v1273
    %1325 = vmatprep.subr.bf16.mxu0 %v1272
    %1326 = vmatpush2.bf16.msra.mxu0 %v1271
    %1327 = vmatprep.subr.bf16.mxu0 %v1270
    %1328 = vmatpush2.bf16.msra.mxu0 %v1269
    %1329 = vmatprep.subr.bf16.mxu0 %v1268
    %1330 = vmatpush2.bf16.msra.mxu0 %v1267
    %1331 = vmatprep.subr.bf16.mxu0 %v1266
    %1332 = vmatpush2.bf16.msra.mxu0 %v1265
    %1333 = vmatprep.subr.bf16.mxu0 %v1264
    %1334 = vmatpush2.bf16.msra.mxu0 %v1263
    %1335 = vmatprep.subr.bf16.mxu0 %v1262
    %1336 = vmatpush2.bf16.msra.mxu0 %v1261
    %1337 = vmatprep.subr.bf16.mxu0 %v1260
    %1338 = vmatpush2.bf16.msra.mxu0 %v1259
    %1339 = vmatprep.mubr.bf16.mxu0 %v879
    %1340 = vmatmul.mubr.bf16.gmra.mxu0 %v878
    %v1341 = vpop.f32.mrf.mxu0
    %v1342 = vadd.f32 %v1141, %v1341
    %v1343 = vpop.f32.mrf.mxu0
    %v1344 = vadd.f32 %v1143, %v1343
    %v1345 = vpop.f32.mrf.mxu0
    %v1346 = vpop.f32.mrf.mxu0
    %1347 = vdwg.mxu0
    %v1348 = vld [vmem:[%s7] sm:$0x3]
    %v1350 = vlaneseq
    %v1351 = vshrl.u32 %v1350, 7
    %v1352 = vsub.s32 0, %v1351
    %v1353 = vrot.slane %v1348, %v1352
    %v1354 = vlaneseq
    %v1355 = vshrl.u32 %v1354, 7
    %v1356 = vsub.s32 1, %v1355
    %v1357 = vrot.slane %v1348, %v1356
    %v1360 = vadd.f32 %v1342, %v1353
    %v1361 = vadd.f32 %v1344, %v1357
    %v1362 = vmax.f32 %v1360, 0.0
    %v1363 = vmax.f32 %v1361, 0.0
    %v1364 = vld [vmem:[%s8] sm:$0x3]
    %v1366 = vlaneseq
    %v1367 = vshrl.u32 %v1366, 7
    %v1368 = vsub.s32 0, %v1367
    %v1369 = vrot.slane %v1364, %v1368
    %v1370 = vlaneseq
    %v1371 = vshrl.u32 %v1370, 7
    %v1372 = vsub.s32 1, %v1371
    %v1373 = vrot.slane %v1364, %v1372
    %v1376 = vmul.f32 %v1362, %v1369
    %v1377 = vmul.f32 %v1363, %v1373
    %vm1378 = vcmask 1041408
    %v1379 = vsel %vm1378, %v1376, 0.0
    %v1380 = vsel %vm1378, %v1377, 0.0
    %v1381 = vadd.f32 %v1379, %v1380
    %1382 = vadd.xlane.f32.xlu0 %v1381
    %v1383 = vpop.xlane.xlu0 %1382
    %v1384 = vld [vmem:[#allocation2] sm:$0x1]
    %v1386 = vlaneseq
    %v1387 = vshrl.u32 %v1386, 7
    %v1388 = vsub.s32 0, %v1387
    %v1389 = vrot.slane %v1384, %v1388
    %v1391 = vadd.f32 %v1383, %v1389
    %vm1392 = vcmask 1024
    %1393 = vst.msk [vmem:[%s10] sm:$0x3] %vm1392, %v1391
    // Predicated region
    $region62: #{tpu_custom_call.1} parent=1 // pred_check
      _
    $region63: #{tpu_custom_call.1} parent=1 // pred_check_branch
      %1395 = sbr.rel (0) target = $region65
    $region64: #{tpu_custom_call.1} parent=1 // pred_region
      _
    $region65: #{tpu_custom_call.1} parent=1 // pred_fallthru
      _
    // Predicated region
    $region66: #{tpu_custom_call.1} parent=1 // pred_check
      _
    $region67: #{tpu_custom_call.1} parent=1 // pred_check_branch
      %1397 = sbr.rel (0) target = $region69
    $region68: #{tpu_custom_call.1} parent=1 // pred_region
      _
    $region69: #{tpu_custom_call.1} parent=1 // pred_fallthru
      _
    %1398 = vsyncpa [#allocation4], 1
    %1399 = vsyncpa [#allocation6], 1
    %1400 = vsyncpa [#allocation9], 1

</llo_original>
